<compile_context>
chip_gen: v5e
topology: v5e:2x2
jax: 0.10.0
libtpu: 0.0.40
codegen_flags: <defaults>
</compile_context>

<pallas_src>
import jax
import jax.numpy as jnp
from jax.experimental import pallas as pl
from jax.experimental.pallas import tpu as pltpu


# ----------------------------- kernel body ---------------------------------
def _model_kernel(x_ref, o_ref):
    x = x_ref[...]
    # MA(x, y) = x + y ; MM(y, z) = y * z ; MASMM(x, y, z) = (x + y) - (y * z)
    masmm = (x + x) - (x * x)
    # Model: MA(x, MASMM(x, x, x)) -- keep the original op composition/order.
    o_ref[...] = x + masmm


# ------------------------------ helpers -------------------------------------
def _round_up(a, b):
    return -(-a // b) * b


def _device_tile_config():
    """(tile_bytes_per_buffer, vmem_limit_bytes) tuned per TPU generation."""
    kind = ""
    try:
        kind = jax.devices()[0].device_kind.lower()
    except Exception:
        pass
    if "v6" in kind or "trillium" in kind:
        # 128 MiB physical VMEM; 8 MiB tiles x 4 pipeline buffers = 32 MiB.
        return 8 * 1024 * 1024, 64 * 1024 * 1024
    if "v5" in kind:
        # 128 MiB physical VMEM; 4 MiB tiles, raise past the 16 MiB default.
        return 4 * 1024 * 1024, 48 * 1024 * 1024
    # v7x (64 MiB physical VMEM per TC) or unknown generation: stay conservative.
    return 4 * 1024 * 1024, 40 * 1024 * 1024


_LANE_CANDIDATES = (2048, 1024, 512, 256, 128)


def _choose_lanes(n, sublane):
    """Widest lane width (multiple of 128) that divides n, preferring >= sublane rows."""
    for lanes in _LANE_CANDIDATES:
        if n % lanes == 0 and (n // lanes) >= sublane:
            return lanes
    for lanes in _LANE_CANDIDATES:
        if n % lanes == 0:
            return lanes
    return None


def _choose_tile_rows(rows, lanes, itemsize, sublane, tile_bytes):
    """Sublane-aligned tile height; big (VMEM budget) but >= 2 grid steps when possible."""
    if rows <= sublane:
        return rows  # single full-extent block (always legal)
    # VMEM-budget cap, rounded down to the sublane multiple.
    cap = max(sublane, (tile_bytes // (lanes * itemsize)) // sublane * sublane)
    # Cap at ~half the rows so both v7x TensorCores get at least one tile.
    half = _round_up(-(-rows // 2), sublane)
    return max(sublane, min(cap, half))


# ------------------------------- wrapper ------------------------------------
def model_forward(x):
    """x: array (any shape, e.g. NCHW). Returns x + ((x+x) - x*x), same shape/dtype."""
    orig_shape = x.shape
    dtype = x.dtype
    n = x.size
    itemsize = jnp.dtype(dtype).itemsize
    sublane = max(8, 32 // itemsize)  # 8 (f32), 16 (bf16), 32 (int8)
    tile_bytes, vmem_limit = _device_tile_config()

    cparams = pltpu.CompilerParams(
        dimension_semantics=("parallel",),
        vmem_limit_bytes=vmem_limit,
    )

    lanes = _choose_lanes(n, sublane)
    if lanes is not None:
        # ----- lane-dense 2D slab path (free reshape, no padding) -----
        rows = n // lanes
        x2d = x.reshape(rows, lanes)
        tile_r = _choose_tile_rows(rows, lanes, itemsize, sublane, tile_bytes)
        grid = (pl.cdiv(rows, tile_r),)  # partial last block is masked
        out2d = pl.pallas_call(
            _model_kernel,
            out_shape=jax.ShapeDtypeStruct((rows, lanes), dtype),
            grid_spec=pltpu.PrefetchScalarGridSpec(
                num_scalar_prefetch=0,
                grid=grid,
                in_specs=[pl.BlockSpec((tile_r, lanes), lambda i: (i, 0))],
                out_specs=pl.BlockSpec((tile_r, lanes), lambda i: (i, 0)),
            ),
            compiler_params=cparams,
        )(x2d)
        return out2d.reshape(orig_shape)

    # ----- flat 1-D fallback (element count not a multiple of 128) -----
    # Still no padded copy: the partial last block is masked by Pallas.
    base = 1024  # 8 sublanes * 128 lanes worth of elements
    x1d = x.reshape(-1)
    max_len = max(base, (tile_bytes // itemsize) // base * base)
    if n > 2 * base:
        tile_len = min(max_len, _round_up(-(-n // 2), base))  # >= 2 grid steps
        grid = (pl.cdiv(n, tile_len),)
    else:
        tile_len = n  # single full-extent block
        grid = (1,)
    out1d = pl.pallas_call(
        _model_kernel,
        out_shape=jax.ShapeDtypeStruct((n,), dtype),
        grid_spec=pltpu.PrefetchScalarGridSpec(
            num_scalar_prefetch=0,
            grid=grid,
            in_specs=[pl.BlockSpec((tile_len,), lambda i: (i,))],
            out_specs=pl.BlockSpec((tile_len,), lambda i: (i,)),
        ),
        compiler_params=cparams,
    )(x1d)
    return out1d.reshape(orig_shape)


if __name__ == "__main__":
    key = jax.random.PRNGKey(0)

    def _ref(v):
        return v + ((v + v) - (v * v))

    # Primary test: small NCHW-style input consistent with the exporter recipe.
    x = jax.random.normal(key, (2, 4, 16, 16), dtype=jnp.float32)
    out = jax.block_until_ready(model_forward(x))
    assert out.shape == x.shape and out.dtype == x.dtype
    assert jnp.allclose(out, _ref(x), atol=1e-6, rtol=1e-6)

    # Partial-last-block coverage: rows (15) not a multiple of the tile height.
    k1, k2 = jax.random.split(key)
    x_b = jax.random.normal(k1, (2, 3, 40, 128), dtype=jnp.float32)
    out_b = jax.block_until_ready(model_forward(x_b))
    assert out_b.shape == x_b.shape
    assert jnp.allclose(out_b, _ref(x_b), atol=1e-6, rtol=1e-6)

    # Non-128-multiple element count -> flat 1-D path (no padding copies).
    x_c = jax.random.normal(k2, (3, 5, 7, 11), dtype=jnp.float32)
    out_c = jax.block_until_ready(model_forward(x_c))
    assert out_c.shape == x_c.shape
    assert jnp.allclose(out_c, _ref(x_c), atol=1e-6, rtol=1e-6)

    print("KERNEL_OK")
</pallas_src>

<mosaic_0001>
module attributes {stable_mosaic.version = 11 : i64} {
  func.func @_model_kernel(%arg0: i32, %arg1: memref<8x256xf32, #tpu.memory_space<vmem>>, %arg2: memref<8x256xf32, #tpu.memory_space<vmem>>) attributes {dimension_semantics = [#tpu.dimension_semantics<parallel>], iteration_bounds = array<i64: 1>, scalar_prefetch = 0 : i64, scratch_operands = 0 : i64, tpu.core_type = #tpu.core_type<tc>, window_params = [{transform_indices = @transform_0, window_bounds = array<i64: 8, 256>}, {transform_indices = @transform_1, window_bounds = array<i64: 8, 256>}]} {
    %c0 = arith.constant 0 : index
    %c0_0 = arith.constant 0 : index
    %0 = vector.load %arg1[%c0, %c0_0] : memref<8x256xf32, #tpu.memory_space<vmem>>, vector<8x256xf32>
    %1 = arith.addf %0, %0 : vector<8x256xf32>
    %2 = arith.mulf %0, %0 : vector<8x256xf32>
    %3 = arith.subf %1, %2 : vector<8x256xf32>
    %4 = arith.addf %0, %3 : vector<8x256xf32>
    %c0_1 = arith.constant 0 : index
    %c0_2 = arith.constant 0 : index
    %5 = vector.load %arg2[%c0_1, %c0_2] : memref<8x256xf32, #tpu.memory_space<vmem>>, vector<8x256xf32>
    tpu.vector_store %arg2[%c0_1, %c0_2], %4 {strides = array<i32>} : memref<8x256xf32, #tpu.memory_space<vmem>>, vector<8x256xf32>,
    return
  }
  func.func @transform_0(%arg0: i32) -> (i32, i32) {
    %c0_i32 = arith.constant 0 : i32
    %c0_i32_0 = arith.constant 0 : i32
    return %arg0, %c0_i32 : i32, i32
  }
  func.func @transform_1(%arg0: i32) -> (i32, i32) {
    %c0_i32 = arith.constant 0 : i32
    %c0_i32_0 = arith.constant 0 : i32
    return %arg0, %c0_i32 : i32, i32
  }
}

</mosaic_0001>

<llo_original>
// kernel: tpu_custom_call.1
$region0: #{tpu_custom_call.1}
  #allocation0 [shape = 'u32[]', space=smem, size = 0x4, offset = 0x4, fixed_abs, tag = 'smem constant byte address 0x4 - core index']
  #allocation1 [shape = 'u32[72,128]{1,0:T(1,128)}', space=vmem, size = 0x9000, scoped, tag = 'internal scratch']
  %s0 = inlined_call_operand.hbm [shape: f32[8,256], index: 0, kind: input, shape index: {}]
  %s1 = inlined_call_operand.hbm [shape: f32[8,256], index: 1, kind: output, shape index: {}]
  %s2 = sld [smem:[#allocation0]]
  $region18: #{tpu_custom_call.1} parent=0
    _
  %s4 = ssub.s32 1, %s2
  %s5 = scalar_select 0, %s4, %s2
  $region1: #{tpu_custom_call.1} parent=0
    #allocation2 [shape = 'u8[8192]{0}', space=vmem, size = 0x2000, scoped, tag = 'input window, operand 0, single buffered']
    #allocation3 [shape = 's32[1]{0}', space=sflag, size = 0x4, scoped, tag = 'scoped memory for tpu_custom_call.1']
    #allocation4 [shape = 's32[1]{0}', space=sflag, size = 0x4, scoped, tag = 'scoped memory for tpu_custom_call.1']
    #allocation5 [shape = 'u8[8192]{0}', space=vmem, size = 0x2000, scoped, tag = 'output window, operand 0, single buffered']
    %6 = vsyncpa [#allocation3], 0
    %7 = vsyncpa [#allocation4], 0
    // Predicated region
    $region2: #{tpu_custom_call.1} parent=1 // pred_check
      _
    $region3: #{tpu_custom_call.1} parent=1 // pred_check_branch
      %9 = sbr.rel (0) target = $region5
    $region4: #{tpu_custom_call.1} parent=1 // pred_region
      %11 = vsyncadd [#allocation3], 0
      %s13 = sshll.u32 %s0, 4
      %s14 = int_to_ptr.hbm [resolvable:$true] %s13
      %s15 = sshll.u32 [#allocation2], 4
      %s16 = int_to_ptr.vmem [resolvable:$true] %s15
      %18 = dma.hbm_to_vmem [thread:$0]  %s14, 256, %s16, [#allocation3]
    $region5: #{tpu_custom_call.1} parent=1 // pred_fallthru
      _
    // Predicated region
    $region6: #{tpu_custom_call.1} parent=1 // pred_check
      _
    $region7: #{tpu_custom_call.1} parent=1 // pred_check_branch
      %20 = sbr.rel (0) target = $region9
    $region8: #{tpu_custom_call.1} parent=1 // pred_region
      %22 = dma.done [#allocation3], 256
    $region9: #{tpu_custom_call.1} parent=1 // pred_fallthru
      _
    %v23 = vld [vmem:[#allocation2] sm:$0xff]
    %v24 = vld [vmem:[#allocation2 + $0x8] sm:$0xff]
    %v25 = vadd.f32 %v23, %v23
    %v26 = vadd.f32 %v24, %v24
    %v27 = vmul.f32 %v23, %v23
    %v28 = vmul.f32 %v24, %v24
    %v29 = vsub.f32 %v25, %v27
    %v30 = vsub.f32 %v26, %v28
    %v31 = vadd.f32 %v23, %v29
    %v32 = vadd.f32 %v24, %v30
    %33 = vst [vmem:[#allocation5] sm:$0xff] %v31
    %34 = vst [vmem:[#allocation5 + $0x8] sm:$0xff] %v32
    // Predicated region
    $region10: #{tpu_custom_call.1} parent=1 // pred_check
      _
    $region11: #{tpu_custom_call.1} parent=1 // pred_check_branch
      %36 = sbr.rel (0) target = $region13
    $region12: #{tpu_custom_call.1} parent=1 // pred_region
      %38 = vsyncadd [#allocation4], 0
      %s40 = sshll.u32 [#allocation5], 4
      %s41 = int_to_ptr.vmem [resolvable:$true] %s40
      %s42 = sshll.u32 %s1, 4
      %s43 = int_to_ptr.hbm [resolvable:$true] %s42
      %45 = dma.vmem_to_hbm [thread:$0]  %s41, 256, %s43, [#allocation4]
    $region13: #{tpu_custom_call.1} parent=1 // pred_fallthru
      _
    // Predicated region
    $region14: #{tpu_custom_call.1} parent=1 // pred_check
      _
    $region15: #{tpu_custom_call.1} parent=1 // pred_check_branch
      %47 = sbr.rel (0) target = $region17
    $region16: #{tpu_custom_call.1} parent=1 // pred_region
      %49 = dma.done [#allocation4], 256
    $region17: #{tpu_custom_call.1} parent=1 // pred_fallthru
      _
    %50 = vsyncpa [#allocation3], 1
    %51 = vsyncpa [#allocation4], 1

</llo_original>
